<compile_context>
chip_gen: v6e
topology: v6e:2x2x1
jax: 0.10.0
libtpu: 0.0.40
codegen_flags: <defaults>
</compile_context>

<pallas_src>
import functools
import math

import jax
import jax.numpy as jnp
from jax.experimental import pallas as pl
from jax.experimental.pallas import tpu as pltpu

_LANE = 128
_TARGET_BLOCK_BYTES = 4 * 1024 * 1024   # ~4 MiB per array per grid step
_VMEM_LIMIT_BYTES = 48 << 20            # explicit: > v5e's 16 MiB default,
                                        # < v7x's 64 MiB physical (headroom)


# ----------------------------- kernels ------------------------------------ #

def _drop_path_kernel(scale_ref, x_ref, o_ref):
    """o = x * scale; scale is f32 (tile_b, 1), broadcast over lanes."""
    o_ref[...] = (x_ref[...].astype(jnp.float32) * scale_ref[...]).astype(o_ref.dtype)


def _drop_path_add_kernel(scale_ref, x_ref, skip_ref, o_ref):
    """Fused residual: o = skip + x * scale."""
    scaled = x_ref[...].astype(jnp.float32) * scale_ref[...]
    o_ref[...] = (skip_ref[...].astype(jnp.float32) + scaled).astype(o_ref.dtype)


# ----------------------------- tiling ------------------------------------- #

def _sublane(dtype) -> int:
    """Native packed sublane count: 8 (f32), 16 (bf16/f16), 32 (int8/fp8)."""
    return max(8, 32 // jnp.dtype(dtype).itemsize)


def _choose_tiles(B, N, dtype, target_bytes):
    """Pick (tile_b, tile_n): each dim is sublane/128-aligned OR equal to the
    full dim (exempt from the alignment rule); each block ~target_bytes."""
    itemsize = jnp.dtype(dtype).itemsize
    sub = _sublane(dtype)
    target_elems = max(_LANE, target_bytes // itemsize)

    # Whole slab fits in one block: full-dim block, exempt from alignment.
    if B * N <= target_elems:
        return B, N

    # Lane-axis tile: multiple of 128, capped so `sub` rows fill the budget.
    cap = max(_LANE, (target_elems // sub) // _LANE * _LANE)
    tile_n = N if N <= cap else cap          # full dim if it fits, else 128-aligned

    # Batch-axis tile: fill the remaining budget with sublane-aligned rows.
    rows = max(1, target_elems // tile_n)
    if rows >= B or B <= sub:
        tile_b = B                           # full dim, exempt
    else:
        tile_b = max(sub, (rows // sub) * sub)
        tile_b = min(tile_b, (B // sub) * sub)
    return tile_b, tile_n


# ----------------------------- wrappers ------------------------------------ #

def _per_sample_scale(key, B, keep_prob):
    """Per-sample scale = floor(keep_prob + U[0,1)) / keep_prob, kept in f32."""
    u = jax.random.uniform(key, (B,), dtype=jnp.float32)
    mask = jnp.floor(keep_prob + u)
    return (mask / keep_prob).reshape(B, 1)


def _launch(kernel, scale, arrays, out_dtype, B, N, block_bytes):
    tile_b, tile_n = _choose_tiles(B, N, out_dtype, block_bytes)
    grid = (pl.cdiv(B, tile_b), pl.cdiv(N, tile_n))
    data_spec = pl.BlockSpec((tile_b, tile_n), lambda b, n: (b, n))
    scale_spec = pl.BlockSpec((tile_b, 1), lambda b, n: (b, 0))
    return pl.pallas_call(
        kernel,
        out_shape=jax.ShapeDtypeStruct((B, N), out_dtype),
        grid_spec=pl.GridSpec(
            grid=grid,
            in_specs=[scale_spec] + [data_spec] * len(arrays),
            out_specs=data_spec,
        ),
        compiler_params=pltpu.CompilerParams(
            dimension_semantics=("parallel", "parallel"),
            vmem_limit_bytes=_VMEM_LIMIT_BYTES,
        ),
    )(scale, *arrays)


@functools.partial(jax.jit, static_argnames=("drop_prob", "training", "block_bytes"))
def drop_path(x, key, drop_prob: float = 0.0, training: bool = False,
              block_bytes: int = _TARGET_BLOCK_BYTES):
    """Pallas DropPath forward.

    x        : (B, ...) array (any trailing dims, e.g. NCHW or (B, T, D))
    key      : jax PRNG key used to draw the per-sample mask
    drop_prob: probability of dropping the whole residual path for a sample
    training : training-mode flag
    """
    if drop_prob == 0.0 or not training:
        return x

    keep_prob = 1.0 - drop_prob
    orig_shape = x.shape
    B = orig_shape[0]
    N = math.prod(orig_shape[1:]) if len(orig_shape) > 1 else 1

    scale = _per_sample_scale(key, B, keep_prob)            # f32 (B, 1)
    x2 = x.reshape(B, N)                                    # lane-dense, no pad
    out2 = _launch(_drop_path_kernel, scale, [x2], x.dtype, B, N, block_bytes)
    return out2.reshape(orig_shape)


@functools.partial(jax.jit, static_argnames=("drop_prob", "training", "block_bytes"))
def drop_path_add(skip, x, key, drop_prob: float = 0.0, training: bool = False,
                  block_bytes: int = _TARGET_BLOCK_BYTES):
    """Fused `skip + drop_path(x)` — removes one full HBM round-trip of the
    scaled intermediate in the common residual-block usage."""
    if drop_prob == 0.0 or not training:
        return skip + x

    keep_prob = 1.0 - drop_prob
    orig_shape = x.shape
    B = orig_shape[0]
    N = math.prod(orig_shape[1:]) if len(orig_shape) > 1 else 1

    scale = _per_sample_scale(key, B, keep_prob)            # f32 (B, 1)
    x2 = x.reshape(B, N)
    s2 = skip.reshape(B, N)
    out2 = _launch(_drop_path_add_kernel, scale, [x2, s2], x.dtype, B, N, block_bytes)
    return out2.reshape(orig_shape)


# ----------------------------- self-test ----------------------------------- #

if __name__ == "__main__":
    root = jax.random.PRNGKey(0)
    kx, kmask, kskip, k2, k3 = jax.random.split(root, 5)

    drop_prob = 0.25
    keep_prob = 1.0 - drop_prob

    def ref_drop_path(x, key):
        B = x.shape[0]
        u = jax.random.uniform(key, (B,), dtype=jnp.float32)
        mask = jnp.floor(keep_prob + u)
        scale = (mask / keep_prob).reshape((B,) + (1,) * (x.ndim - 1))
        return (x.astype(jnp.float32) * scale).astype(x.dtype)

    # 1) small NCHW f32 input consistent with the module (single-block path).
    x = jax.random.normal(kx, (2, 4, 16, 16), dtype=jnp.float32)
    out = jax.block_until_ready(drop_path(x, kmask, drop_prob=drop_prob, training=True))
    assert out.shape == x.shape and out.dtype == x.dtype
    assert jnp.allclose(out, ref_drop_path(x, kmask), atol=1e-6, rtol=1e-6)

    # 2) ragged batch (10) and non-128-multiple N (231), forced multi-block grid
    #    (small block_bytes) — exercises masked boundary tiles, no pad/slice.
    x2 = jax.random.normal(k2, (10, 3, 77), dtype=jnp.float32)
    out2 = jax.block_until_ready(
        drop_path(x2, kmask, drop_prob=drop_prob, training=True, block_bytes=8192))
    assert jnp.allclose(out2, ref_drop_path(x2, kmask), atol=1e-6, rtol=1e-6)

    # 3) bf16 with dtype-aware sublane tiling (tile_b=16) and ragged lane tile.
    x3 = jax.random.normal(k3, (32, 3, 50), dtype=jnp.bfloat16)
    out3 = jax.block_until_ready(
        drop_path(x3, kmask, drop_prob=drop_prob, training=True, block_bytes=4096))
    assert jnp.allclose(out3.astype(jnp.float32),
                        ref_drop_path(x3, kmask).astype(jnp.float32),
                        atol=1e-2, rtol=1e-2)

    # 4) fused residual variant: y = skip + drop_path(x).
    skip = jax.random.normal(kskip, x.shape, dtype=x.dtype)
    out4 = jax.block_until_ready(
        drop_path_add(skip, x, kmask, drop_prob=drop_prob, training=True))
    ref4 = skip + ref_drop_path(x, kmask)
    assert jnp.allclose(out4, ref4, atol=1e-6, rtol=1e-6)

    # 5) eval / drop_prob==0 path -> identity (no kernel launch).
    out5 = jax.block_until_ready(drop_path(x, kmask, drop_prob=drop_prob, training=False))
    assert jnp.array_equal(out5, x)

    print("KERNEL_OK")
</pallas_src>

<mosaic_0001>
module attributes {stable_mosaic.version = 11 : i64} {
  func.func @_drop_path_kernel(%arg0: i32, %arg1: i32, %arg2: memref<2x1xf32, #tpu.memory_space<vmem>>, %arg3: memref<2x1024xf32, #tpu.memory_space<vmem>>, %arg4: memref<2x1024xf32, #tpu.memory_space<vmem>>) attributes {dimension_semantics = [#tpu.dimension_semantics<parallel>, #tpu.dimension_semantics<parallel>], iteration_bounds = array<i64: 1, 1>, scalar_prefetch = 0 : i64, scratch_operands = 0 : i64, tpu.core_type = #tpu.core_type<tc>, window_params = [{transform_indices = @transform_0, window_bounds = array<i64: 2, 1>}, {transform_indices = @transform_1, window_bounds = array<i64: 2, 1024>}, {transform_indices = @transform_2, window_bounds = array<i64: 2, 1024>}]} {
    %c0 = arith.constant 0 : index
    %c0_0 = arith.constant 0 : index
    %0 = vector.load %arg3[%c0, %c0_0] : memref<2x1024xf32, #tpu.memory_space<vmem>>, vector<2x1024xf32>
    %c0_1 = arith.constant 0 : index
    %c0_2 = arith.constant 0 : index
    %1 = vector.load %arg2[%c0_1, %c0_2] : memref<2x1xf32, #tpu.memory_space<vmem>>, vector<2x1xf32>
    %2 = vector.broadcast %1 : vector<2x1xf32> to vector<2x1024xf32>
    %3 = arith.mulf %0, %2 : vector<2x1024xf32>
    %c0_3 = arith.constant 0 : index
    %c0_4 = arith.constant 0 : index
    %4 = vector.load %arg4[%c0_3, %c0_4] : memref<2x1024xf32, #tpu.memory_space<vmem>>, vector<2x1024xf32>
    tpu.vector_store %arg4[%c0_3, %c0_4], %3 {strides = array<i32>} : memref<2x1024xf32, #tpu.memory_space<vmem>>, vector<2x1024xf32>,
    return
  }
  func.func @transform_0(%arg0: i32, %arg1: i32) -> (i32, i32) {
    %c0_i32 = arith.constant 0 : i32
    %c0_i32_0 = arith.constant 0 : i32
    return %arg0, %c0_i32 : i32, i32
  }
  func.func @transform_1(%arg0: i32, %arg1: i32) -> (i32, i32) {
    %c0_i32 = arith.constant 0 : i32
    return %arg0, %arg1 : i32, i32
  }
  func.func @transform_2(%arg0: i32, %arg1: i32) -> (i32, i32) {
    %c0_i32 = arith.constant 0 : i32
    return %arg0, %arg1 : i32, i32
  }
}

</mosaic_0001>

<llo_original>
// kernel: drop_path.1
$region0: #{drop_path.1}
  #allocation0 [shape = 'u32[]', space=smem, size = 0x4, offset = 0x4, fixed_abs, tag = 'smem constant byte address 0x4 - core index']
  #allocation1 [shape = 'u32[144,128]{1,0:T(1,128)}', space=vmem, size = 0x12000, scoped, tag = 'internal scratch']
  %s0 = inlined_call_operand.vmem [shape: f32[2,1], index: 0, kind: input, shape index: {}]
  %s1 = inlined_call_operand.vmem [shape: f32[2,1024], index: 1, kind: input, shape index: {}]
  %s2 = inlined_call_operand.vmem [shape: f32[2,1024], index: 2, kind: output, shape index: {}]
  %s3 = sld [smem:[#allocation0]]
  $region18: #{drop_path.1} parent=0
    _
  %s5 = ssub.s32 1, %s3
  %s6 = scalar_select 0, %s5, %s3
  // Predicated region
  $region2: #{drop_path.1} parent=0 // pred_check
    _
  $region3: #{drop_path.1} parent=0 // pred_check_branch
    %8 = sbr.rel (0) target = $region5
  $region4: #{drop_path.1} parent=0 // pred_region
    _
  $region5: #{drop_path.1} parent=0 // pred_fallthru
    _
  // Predicated region
  $region6: #{drop_path.1} parent=0 // pred_check
    _
  $region7: #{drop_path.1} parent=0 // pred_check_branch
    %10 = sbr.rel (0) target = $region9
  $region8: #{drop_path.1} parent=0 // pred_region
    _
  $region9: #{drop_path.1} parent=0 // pred_fallthru
    _
  %v11 = vld [vmem:[%s1] sm:$0xff]
  %v12 = vld [vmem:[%s1 + $0x8] sm:$0xff]
  %v13 = vld [vmem:[%s0] sm:$0x3]
  %15 = vset.pattern.permute.xlu0 0
  %16 = vperm.xlu0 %15, %v13
  %v17 = vpop.permute.xlu0 %16
  %v19 = vunpack.c.l.s4 269488144
  %v20 = vunpack.c.0.s8 %v19
  %v21 = vlaneseq
  %v22 = vshrl.u32 %v21, 7
  %v23 = vsub.s32 %v20, %v22
  %v24 = vrot.slane %v17, %v23
  %v26 = vmul.f32 %v11, %v24
  %v27 = vmul.f32 %v12, %v24
  %28 = vst [vmem:[%s2] sm:$0xff] %v26
  %29 = vst [vmem:[%s2 + $0x8] sm:$0xff] %v27
  // Predicated region
  $region10: #{drop_path.1} parent=0 // pred_check
    _
  $region11: #{drop_path.1} parent=0 // pred_check_branch
    %31 = sbr.rel (0) target = $region13
  $region12: #{drop_path.1} parent=0 // pred_region
    _
  $region13: #{drop_path.1} parent=0 // pred_fallthru
    _
  // Predicated region
  $region14: #{drop_path.1} parent=0 // pred_check
    _
  $region15: #{drop_path.1} parent=0 // pred_check_branch
    %33 = sbr.rel (0) target = $region17
  $region16: #{drop_path.1} parent=0 // pred_region
    _
  $region17: #{drop_path.1} parent=0 // pred_fallthru
    _

</llo_original>
